<compile_context>
chip_gen: v6e
topology: v6e:2x2x1
jax: 0.10.0
libtpu: 0.0.40
codegen_flags: <defaults>
</compile_context>

<pallas_src>
import numpy as np
import jax
import jax.numpy as jnp
from jax.experimental import pallas as pl
from jax.experimental.pallas import tpu as pltpu

# Small, module-consistent sizes (in_channels=3, classes=9 per the module).
N, CIN, H, W = 2, 3, 16, 16
C_OUT = 9
KH = KW = 3
HW = H * W                 # 256
LANES = N * HW             # 512 -> lane axis (4 x 128, unmasked vst)
KK = KH * KW * CIN         # 27 im2col rows
KPAD = 32                  # K padded to a sublane multiple (27 taps + 1 bias-ones + 4 zero)
MPAD = 16                  # C_OUT padded to a sublane multiple


def _make_border_mask():
    """(KPAD, LANES) f32 validity mask for SAME zero padding, batch-tiled on lanes.

    Row layout matches the patches scratch: row = tap*CIN + c for tap=(ky,kx).
    Row KK is the bias 'ones' row (kept), rows KK+1.. are zeroed padding.
    """
    mask = np.zeros((KPAD, LANES), np.float32)
    row = np.arange(HW) // W
    col = np.arange(HW) % W
    for t in range(KH * KW):
        ky, kx = divmod(t, KW)
        dy, dx = ky - 1, kx - 1
        valid = ((row + dy >= 0) & (row + dy < H) &
                 (col + dx >= 0) & (col + dx < W)).astype(np.float32)
        # lane layout is batch-major (n*HW + q) -> tile the per-image mask N times
        mask[t * CIN:(t + 1) * CIN, :] = np.tile(valid, N)[None, :]
    mask[KK, :] = 1.0          # bias row survives the mask multiply
    return mask


_BORDER_MASK = _make_border_mask()


def _conv_head_kernel(x_ref, w_ref, mask_ref, o_ref, patches_ref):
    # x_ref:       (CIN, LANES)    batch fused onto lanes
    # w_ref:       (MPAD, KPAD)    im2col weight, col KK = bias, padding rows/cols zero
    # mask_ref:    (KPAD, LANES)   precomputed border masks (+ ones / zero pad rows)
    # o_ref:       (MPAD, LANES)   lane-dense output slab
    # patches_ref: (KPAD, LANES)   VMEM scratch for the assembled im2col patches
    x = x_ref[...]                                        # (CIN, LANES)

    # Rows KK..KPAD: write ones once; mask keeps row KK (bias) and zeroes the rest.
    patches_ref[KK:KPAD, :] = jnp.ones((KPAD - KK, LANES), jnp.float32)

    # Assemble the 9 taps (static unroll) directly into the K-padded scratch.
    for t in range(KH * KW):
        ky, kx = divmod(t, KW)
        off = (ky - 1) * W + (kx - 1)                     # flattened spatial shift
        shifted = x if off == 0 else pltpu.roll(x, (-off) % LANES, axis=1)
        patches_ref[t * CIN:(t + 1) * CIN, :] = shifted

    # One VPU multiply applies all border masks (cross-image wraps -> 0),
    # then one lane-dense MXU matmul (bias folded in via the ones row).
    patches = patches_ref[...] * mask_ref[...]            # (KPAD, LANES)
    o_ref[...] = jnp.dot(w_ref[...], patches,
                         preferred_element_type=jnp.float32)


@jax.jit
def seg_qyl_forward(x_nchw, params):
    """x_nchw: (N, CIN, H, W) f32 -> (N, C_OUT, H, W) f32 logits."""
    w, b = params                                         # (3,3,CIN,9), (9,)

    # (N, CIN, H, W) -> (CIN, N*H*W): tiny one-off transpose, lane-fused batch.
    x_fused = jnp.transpose(x_nchw, (1, 0, 2, 3)).reshape(CIN, LANES)

    # Padded im2col weight: rows >= C_OUT zero, col KK = bias, cols > KK zero.
    w_mat = jnp.transpose(w.reshape(KK, C_OUT))           # (9, 27), row order (ky,kx,c)
    w_pad = jnp.zeros((MPAD, KPAD), jnp.float32)
    w_pad = w_pad.at[:C_OUT, :KK].set(w_mat)
    w_pad = w_pad.at[:C_OUT, KK].set(b)                   # bias column

    mask = jnp.asarray(_BORDER_MASK)                      # host-precomputed constant

    out_pad = pl.pallas_call(
        _conv_head_kernel,
        out_shape=jax.ShapeDtypeStruct((MPAD, LANES), jnp.float32),
        in_specs=[
            pl.BlockSpec(memory_space=pltpu.MemorySpace.VMEM),
            pl.BlockSpec(memory_space=pltpu.MemorySpace.VMEM),
            pl.BlockSpec(memory_space=pltpu.MemorySpace.VMEM),
        ],
        out_specs=pl.BlockSpec(memory_space=pltpu.MemorySpace.VMEM),
        scratch_shapes=[pltpu.VMEM((KPAD, LANES), jnp.float32)],
    )(x_fused, w_pad, mask)

    # (MPAD, LANES) -> (C_OUT, N, H, W) -> (N, C_OUT, H, W); cheap slice/reshape.
    out = out_pad[:C_OUT].reshape(C_OUT, N, H, W)
    return jnp.transpose(out, (1, 0, 2, 3))


def init_params(key):
    kw, kb = jax.random.split(key)
    scale = 0.1
    w = scale * jax.random.normal(kw, (KH, KW, CIN, C_OUT), jnp.float32)
    b = scale * jax.random.normal(kb, (C_OUT,), jnp.float32)
    return (w, b)


def _reference(x_nchw, params):
    """Plain-JAX reference of the stand-in conv head (for sanity check)."""
    w, b = params
    dn = jax.lax.conv_dimension_numbers(x_nchw.shape, w.shape,
                                        ('NCHW', 'HWIO', 'NCHW'))
    out = jax.lax.conv_general_dilated(x_nchw, w, (1, 1), 'SAME',
                                       dimension_numbers=dn)
    return out + b.reshape(1, C_OUT, 1, 1)


if __name__ == "__main__":
    key = jax.random.PRNGKey(0)
    kx, kp = jax.random.split(key)
    x = jax.random.normal(kx, (N, CIN, H, W), jnp.float32)
    params = init_params(kp)

    out = jax.block_until_ready(seg_qyl_forward(x, params))
    ref = jax.block_until_ready(_reference(x, params))

    assert out.shape == (N, C_OUT, H, W)
    assert jnp.allclose(out, ref, atol=1e-3, rtol=1e-3)

    print("KERNEL_OK")
</pallas_src>

<mosaic_0001>
module attributes {stable_mosaic.version = 11 : i64} {
  func.func @_conv_head_kernel(%arg0: memref<3x512xf32, #tpu.memory_space<vmem>>, %arg1: memref<16x32xf32, #tpu.memory_space<vmem>>, %arg2: memref<32x512xf32, #tpu.memory_space<vmem>>, %arg3: memref<16x512xf32, #tpu.memory_space<vmem>>, %arg4: memref<32x512xf32, #tpu.memory_space<vmem>>) attributes {dimension_semantics = [], scalar_prefetch = 0 : i64, scratch_operands = 1 : i64, tpu.core_type = #tpu.core_type<tc>} {
    %c0 = arith.constant 0 : index
    %c0_0 = arith.constant 0 : index
    %0 = vector.load %arg0[%c0, %c0_0] : memref<3x512xf32, #tpu.memory_space<vmem>>, vector<3x512xf32>
    %cst = arith.constant 1.000000e+00 : f32
    %1 = vector.broadcast %cst : f32 to vector<5x512xf32>
    %c27 = arith.constant 27 : index
    %c0_1 = arith.constant 0 : index
    %2 = vector.load %arg4[%c27, %c0_1] : memref<32x512xf32, #tpu.memory_space<vmem>>, vector<5x512xf32>
    tpu.vector_store %arg4[%c27, %c0_1], %1 {strides = array<i32>} : memref<32x512xf32, #tpu.memory_space<vmem>>, vector<5x512xf32>,
    %c17_i32 = arith.constant 17 : i32
    %3 = tpu.dynamic_rotate %0 by %c17_i32 dim 1 : vector<3x512xf32>, i32 -> vector<3x512xf32>
    %c0_2 = arith.constant 0 : index
    %c0_3 = arith.constant 0 : index
    %4 = vector.load %arg4[%c0_2, %c0_3] : memref<32x512xf32, #tpu.memory_space<vmem>>, vector<3x512xf32>
    tpu.vector_store %arg4[%c0_2, %c0_3], %3 {strides = array<i32>} : memref<32x512xf32, #tpu.memory_space<vmem>>, vector<3x512xf32>,
    %c16_i32 = arith.constant 16 : i32
    %5 = tpu.dynamic_rotate %0 by %c16_i32 dim 1 : vector<3x512xf32>, i32 -> vector<3x512xf32>
    %c3 = arith.constant 3 : index
    %c0_4 = arith.constant 0 : index
    %6 = vector.load %arg4[%c3, %c0_4] : memref<32x512xf32, #tpu.memory_space<vmem>>, vector<3x512xf32>
    tpu.vector_store %arg4[%c3, %c0_4], %5 {strides = array<i32>} : memref<32x512xf32, #tpu.memory_space<vmem>>, vector<3x512xf32>,
    %c15_i32 = arith.constant 15 : i32
    %7 = tpu.dynamic_rotate %0 by %c15_i32 dim 1 : vector<3x512xf32>, i32 -> vector<3x512xf32>
    %c6 = arith.constant 6 : index
    %c0_5 = arith.constant 0 : index
    %8 = vector.load %arg4[%c6, %c0_5] : memref<32x512xf32, #tpu.memory_space<vmem>>, vector<3x512xf32>
    tpu.vector_store %arg4[%c6, %c0_5], %7 {strides = array<i32>} : memref<32x512xf32, #tpu.memory_space<vmem>>, vector<3x512xf32>,
    %c1_i32 = arith.constant 1 : i32
    %9 = tpu.dynamic_rotate %0 by %c1_i32 dim 1 : vector<3x512xf32>, i32 -> vector<3x512xf32>
    %c9 = arith.constant 9 : index
    %c0_6 = arith.constant 0 : index
    %10 = vector.load %arg4[%c9, %c0_6] : memref<32x512xf32, #tpu.memory_space<vmem>>, vector<3x512xf32>
    tpu.vector_store %arg4[%c9, %c0_6], %9 {strides = array<i32>} : memref<32x512xf32, #tpu.memory_space<vmem>>, vector<3x512xf32>,
    %c12 = arith.constant 12 : index
    %c0_7 = arith.constant 0 : index
    %11 = vector.load %arg4[%c12, %c0_7] : memref<32x512xf32, #tpu.memory_space<vmem>>, vector<3x512xf32>
    tpu.vector_store %arg4[%c12, %c0_7], %0 {strides = array<i32>} : memref<32x512xf32, #tpu.memory_space<vmem>>, vector<3x512xf32>,
    %c511_i32 = arith.constant 511 : i32
    %12 = tpu.dynamic_rotate %0 by %c511_i32 dim 1 : vector<3x512xf32>, i32 -> vector<3x512xf32>
    %c15 = arith.constant 15 : index
    %c0_8 = arith.constant 0 : index
    %13 = vector.load %arg4[%c15, %c0_8] : memref<32x512xf32, #tpu.memory_space<vmem>>, vector<3x512xf32>
    tpu.vector_store %arg4[%c15, %c0_8], %12 {strides = array<i32>} : memref<32x512xf32, #tpu.memory_space<vmem>>, vector<3x512xf32>,
    %c497_i32 = arith.constant 497 : i32
    %14 = tpu.dynamic_rotate %0 by %c497_i32 dim 1 : vector<3x512xf32>, i32 -> vector<3x512xf32>
    %c18 = arith.constant 18 : index
    %c0_9 = arith.constant 0 : index
    %15 = vector.load %arg4[%c18, %c0_9] : memref<32x512xf32, #tpu.memory_space<vmem>>, vector<3x512xf32>
    tpu.vector_store %arg4[%c18, %c0_9], %14 {strides = array<i32>} : memref<32x512xf32, #tpu.memory_space<vmem>>, vector<3x512xf32>,
    %c496_i32 = arith.constant 496 : i32
    %16 = tpu.dynamic_rotate %0 by %c496_i32 dim 1 : vector<3x512xf32>, i32 -> vector<3x512xf32>
    %c21 = arith.constant 21 : index
    %c0_10 = arith.constant 0 : index
    %17 = vector.load %arg4[%c21, %c0_10] : memref<32x512xf32, #tpu.memory_space<vmem>>, vector<3x512xf32>
    tpu.vector_store %arg4[%c21, %c0_10], %16 {strides = array<i32>} : memref<32x512xf32, #tpu.memory_space<vmem>>, vector<3x512xf32>,
    %c495_i32 = arith.constant 495 : i32
    %18 = tpu.dynamic_rotate %0 by %c495_i32 dim 1 : vector<3x512xf32>, i32 -> vector<3x512xf32>
    %c24 = arith.constant 24 : index
    %c0_11 = arith.constant 0 : index
    %19 = vector.load %arg4[%c24, %c0_11] : memref<32x512xf32, #tpu.memory_space<vmem>>, vector<3x512xf32>
    tpu.vector_store %arg4[%c24, %c0_11], %18 {strides = array<i32>} : memref<32x512xf32, #tpu.memory_space<vmem>>, vector<3x512xf32>,
    %c0_12 = arith.constant 0 : index
    %c0_13 = arith.constant 0 : index
    %20 = vector.load %arg4[%c0_12, %c0_13] : memref<32x512xf32, #tpu.memory_space<vmem>>, vector<32x512xf32>
    %c0_14 = arith.constant 0 : index
    %c0_15 = arith.constant 0 : index
    %21 = vector.load %arg2[%c0_14, %c0_15] : memref<32x512xf32, #tpu.memory_space<vmem>>, vector<32x512xf32>
    %22 = arith.mulf %20, %21 : vector<32x512xf32>
    %c0_16 = arith.constant 0 : index
    %c0_17 = arith.constant 0 : index
    %23 = vector.load %arg1[%c0_16, %c0_17] : memref<16x32xf32, #tpu.memory_space<vmem>>, vector<16x32xf32>
    %cst_18 = arith.constant dense<0.000000e+00> : vector<16x512xf32>
    %24 = tpu.matmul %23, %22, %cst_18 {dimension_numbers = #tpu.dot_dimension_numbers<[1], [0], [0], [1], [0, 0, 1, 1], [], []>} : vector<16x32xf32>, vector<32x512xf32>, vector<16x512xf32> -> vector<16x512xf32>
    %c0_19 = arith.constant 0 : index
    %c0_20 = arith.constant 0 : index
    %25 = vector.load %arg3[%c0_19, %c0_20] : memref<16x512xf32, #tpu.memory_space<vmem>>, vector<16x512xf32>
    tpu.vector_store %arg3[%c0_19, %c0_20], %24 {strides = array<i32>} : memref<16x512xf32, #tpu.memory_space<vmem>>, vector<16x512xf32>,
    return
  }
}

</mosaic_0001>

<llo_original>
// kernel: seg_qyl_forward.1
$region0: #{seg_qyl_forward.1}
  #allocation0 [shape = 'u32[]', space=smem, size = 0x4, offset = 0x4, fixed_abs, tag = 'smem constant byte address 0x4 - core index']
  #allocation1 [shape = 'u32[144,128]{1,0:T(1,128)}', space=vmem, size = 0x12000, scoped, tag = 'internal scratch']
  #allocation2 [shape = 'f32[32,512]{1,0:T(8,128)}', space=vmem, size = 0x10000, scoped, tag = 'scratch operand']
  %s0 = inlined_call_operand.vmem [shape: f32[3,512], index: 0, kind: input, shape index: {}]
  %s1 = inlined_call_operand.vmem [shape: f32[16,32], index: 1, kind: input, shape index: {}]
  %s2 = inlined_call_operand.vmem [shape: f32[32,512], index: 2, kind: input, shape index: {}]
  %s3 = inlined_call_operand.vmem [shape: f32[16,512], index: 3, kind: output, shape index: {}]
  %s4 = sld [smem:[#allocation0]]
  $region22: #{seg_qyl_forward.1} parent=0
    _
  %s6 = ssub.s32 1, %s4
  %s7 = scalar_select 0, %s6, %s4
  // Predicated region
  $region2: #{seg_qyl_forward.1} parent=0 // pred_check
    _
  $region3: #{seg_qyl_forward.1} parent=0 // pred_check_branch
    %9 = sbr.rel (0) target = $region5
  $region4: #{seg_qyl_forward.1} parent=0 // pred_region
    _
  $region5: #{seg_qyl_forward.1} parent=0 // pred_fallthru
    _
  // Predicated region
  $region6: #{seg_qyl_forward.1} parent=0 // pred_check
    _
  $region7: #{seg_qyl_forward.1} parent=0 // pred_check_branch
    %11 = sbr.rel (0) target = $region9
  $region8: #{seg_qyl_forward.1} parent=0 // pred_region
    _
  $region9: #{seg_qyl_forward.1} parent=0 // pred_fallthru
    _
  // Predicated region
  $region10: #{seg_qyl_forward.1} parent=0 // pred_check
    _
  $region11: #{seg_qyl_forward.1} parent=0 // pred_check_branch
    %13 = sbr.rel (0) target = $region13
  $region12: #{seg_qyl_forward.1} parent=0 // pred_region
    _
  $region13: #{seg_qyl_forward.1} parent=0 // pred_fallthru
    _
  %v14 = vld [vmem:[%s0] sm:$0x77]
  %v15 = vld [vmem:[%s0 + $0x8] sm:$0x77]
  %16 = vst [vmem:[#allocation2 + $0x60] sm:$0xf8] 1.0
  %17 = vst [vmem:[#allocation2 + $0x68] sm:$0xf8] 1.0
  %18 = vst [vmem:[#allocation2 + $0x70] sm:$0xf8] 1.0
  %19 = vst [vmem:[#allocation2 + $0x78] sm:$0xf8] 1.0
  %v22 = vcombine.high %v14, %v14
  %v23 = vcombine.high %v15, %v15
  %26 = vrot.lane.b32.xlu0 %v14, 17
  %v27 = vpop.permute.xlu0 %26
  %28 = vrot.lane.b32.xlu0 %v22, 17
  %v29 = vpop.permute.xlu0 %28
  %30 = vrot.lane.b32.xlu0 %v15, 17
  %v31 = vpop.permute.xlu0 %30
  %32 = vrot.lane.b32.xlu0 %v23, 17
  %v33 = vpop.permute.xlu0 %32
  %v34 = vlaneseq
  %v35 = vand.u32 %v34, 127
  %vm36 = vcmp.lt.s32.totalorder %v35, 17
  %v37 = vsel %vm36, %v31, %v33
  %v38 = vsel %vm36, %v29, %v31
  %v39 = vsel %vm36, %v27, %v29
  %v40 = vsel %vm36, %v33, %v27
  %41 = vst [vmem:[#allocation2] sm:$0x7] %v40
  %42 = vst [vmem:[#allocation2 + $0x8] sm:$0x7] %v39
  %43 = vst [vmem:[#allocation2 + $0x10] sm:$0x7] %v38
  %44 = vst [vmem:[#allocation2 + $0x18] sm:$0x7] %v37
  %45 = vrot.lane.b32.xlu0 %v14, 16
  %v46 = vpop.permute.xlu0 %45
  %47 = vrot.lane.b32.xlu0 %v22, 16
  %v48 = vpop.permute.xlu0 %47
  %49 = vrot.lane.b32.xlu0 %v15, 16
  %v50 = vpop.permute.xlu0 %49
  %51 = vrot.lane.b32.xlu0 %v23, 16
  %v52 = vpop.permute.xlu0 %51
  %vm53 = vcmp.lt.s32.totalorder %v35, 16
  %v54 = vsel %vm53, %v50, %v52
  %v55 = vsel %vm53, %v48, %v50
  %v56 = vsel %vm53, %v46, %v48
  %v57 = vsel %vm53, %v52, %v46
  %v62 = vrot.slane %v57, 5
  %v63 = vrot.slane %v56, 5
  %v64 = vrot.slane %v55, 5
  %v65 = vrot.slane %v54, 5
  %70 = vst [vmem:[#allocation2] sm:$0x38] %v62
  %71 = vst [vmem:[#allocation2 + $0x8] sm:$0x38] %v63
  %72 = vst [vmem:[#allocation2 + $0x10] sm:$0x38] %v64
  %73 = vst [vmem:[#allocation2 + $0x18] sm:$0x38] %v65
  %74 = vrot.lane.b32.xlu0 %v14, 15
  %v75 = vpop.permute.xlu0 %74
  %76 = vrot.lane.b32.xlu0 %v22, 15
  %v77 = vpop.permute.xlu0 %76
  %78 = vrot.lane.b32.xlu0 %v15, 15
  %v79 = vpop.permute.xlu0 %78
  %80 = vrot.lane.b32.xlu0 %v23, 15
  %v81 = vpop.permute.xlu0 %80
  %vm82 = vcmp.lt.s32.totalorder %v35, 15
  %v83 = vsel %vm82, %v79, %v81
  %v84 = vsel %vm82, %v77, %v79
  %v85 = vsel %vm82, %v75, %v77
  %v86 = vsel %vm82, %v81, %v75
  %v91 = vrot.slane %v86, 2
  %v92 = vrot.slane %v85, 2
  %v93 = vrot.slane %v84, 2
  %v94 = vrot.slane %v83, 2
  %99 = vst [vmem:[#allocation2] sm:$0xc0] %v91
  %100 = vst [vmem:[#allocation2 + $0x8] sm:$0xc0] %v92
  %101 = vst [vmem:[#allocation2 + $0x10] sm:$0xc0] %v93
  %102 = vst [vmem:[#allocation2 + $0x18] sm:$0xc0] %v94
  %103 = vst [vmem:[#allocation2 + $0x20] sm:$0x1] %v91
  %104 = vst [vmem:[#allocation2 + $0x28] sm:$0x1] %v92
  %105 = vst [vmem:[#allocation2 + $0x30] sm:$0x1] %v93
  %106 = vst [vmem:[#allocation2 + $0x38] sm:$0x1] %v94
  %107 = vrot.lane.b32.xlu0 %v14, 1
  %v108 = vpop.permute.xlu0 %107
  %109 = vrot.lane.b32.xlu0 %v22, 1
  %v110 = vpop.permute.xlu0 %109
  %111 = vrot.lane.b32.xlu0 %v15, 1
  %v112 = vpop.permute.xlu0 %111
  %113 = vrot.lane.b32.xlu0 %v23, 1
  %v114 = vpop.permute.xlu0 %113
  %vm115 = vcmp.lt.s32.totalorder %v35, 1
  %v116 = vsel %vm115, %v112, %v114
  %v117 = vsel %vm115, %v110, %v112
  %v118 = vsel %vm115, %v108, %v110
  %v119 = vsel %vm115, %v114, %v108
  %v124 = vrot.slane %v119, 7
  %v125 = vrot.slane %v118, 7
  %v126 = vrot.slane %v117, 7
  %v127 = vrot.slane %v116, 7
  %132 = vst [vmem:[#allocation2 + $0x20] sm:$0xe] %v124
  %133 = vst [vmem:[#allocation2 + $0x28] sm:$0xe] %v125
  %134 = vst [vmem:[#allocation2 + $0x30] sm:$0xe] %v126
  %135 = vst [vmem:[#allocation2 + $0x38] sm:$0xe] %v127
  %v136 = vcombine.low %v14, %v14
  %v137 = vcombine.low %v15, %v15
  %140 = vst [vmem:[#allocation2 + $0x20] sm:$0x70] %v136
  %141 = vst [vmem:[#allocation2 + $0x28] sm:$0x70] %v14
  %142 = vst [vmem:[#allocation2 + $0x30] sm:$0x70] %v137
  %143 = vst [vmem:[#allocation2 + $0x38] sm:$0x70] %v15
  %144 = vrot.lane.b32.xlu0 %v14, 127
  %v145 = vpop.permute.xlu0 %144
  %146 = vrot.lane.b32.xlu0 %v22, 127
  %v147 = vpop.permute.xlu0 %146
  %148 = vrot.lane.b32.xlu0 %v15, 127
  %v149 = vpop.permute.xlu0 %148
  %150 = vrot.lane.b32.xlu0 %v23, 127
  %v151 = vpop.permute.xlu0 %150
  %vm152 = vcmp.lt.s32.totalorder %v35, 127
  %v153 = vsel %vm152, %v149, %v151
  %v154 = vsel %vm152, %v147, %v149
  %v155 = vsel %vm152, %v145, %v147
  %v156 = vsel %vm152, %v151, %v145
  %v161 = vrot.slane %v155, 1
  %v162 = vrot.slane %v154, 1
  %v163 = vrot.slane %v153, 1
  %v164 = vrot.slane %v156, 1
  %169 = vst [vmem:[#allocation2 + $0x20] sm:$0x80] %v161
  %170 = vst [vmem:[#allocation2 + $0x28] sm:$0x80] %v162
  %171 = vst [vmem:[#allocation2 + $0x30] sm:$0x80] %v163
  %172 = vst [vmem:[#allocation2 + $0x38] sm:$0x80] %v164
  %173 = vst [vmem:[#allocation2 + $0x40] sm:$0x3] %v161
  %174 = vst [vmem:[#allocation2 + $0x48] sm:$0x3] %v162
  %175 = vst [vmem:[#allocation2 + $0x50] sm:$0x3] %v163
  %176 = vst [vmem:[#allocation2 + $0x58] sm:$0x3] %v164
  %177 = vrot.lane.b32.xlu0 %v14, 113
  %v178 = vpop.permute.xlu0 %177
  %179 = vrot.lane.b32.xlu0 %v22, 113
  %v180 = vpop.permute.xlu0 %179
  %181 = vrot.lane.b32.xlu0 %v15, 113
  %v182 = vpop.permute.xlu0 %181
  %183 = vrot.lane.b32.xlu0 %v23, 113
  %v184 = vpop.permute.xlu0 %183
  %vm185 = vcmp.lt.s32.totalorder %v35, 113
  %v186 = vsel %vm185, %v182, %v184
  %v187 = vsel %vm185, %v180, %v182
  %v188 = vsel %vm185, %v178, %v180
  %v189 = vsel %vm185, %v184, %v178
  %v194 = vrot.slane %v188, 6
  %v195 = vrot.slane %v187, 6
  %v196 = vrot.slane %v186, 6
  %v197 = vrot.slane %v189, 6
  %202 = vst [vmem:[#allocation2 + $0x40] sm:$0x1c] %v194
  %203 = vst [vmem:[#allocation2 + $0x48] sm:$0x1c] %v195
  %204 = vst [vmem:[#allocation2 + $0x50] sm:$0x1c] %v196
  %205 = vst [vmem:[#allocation2 + $0x58] sm:$0x1c] %v197
  %206 = vrot.lane.b32.xlu0 %v14, 112
  %v207 = vpop.permute.xlu0 %206
  %208 = vrot.lane.b32.xlu0 %v22, 112
  %v209 = vpop.permute.xlu0 %208
  %210 = vrot.lane.b32.xlu0 %v15, 112
  %v211 = vpop.permute.xlu0 %210
  %212 = vrot.lane.b32.xlu0 %v23, 112
  %v213 = vpop.permute.xlu0 %212
  %vm214 = vcmp.lt.s32.totalorder %v35, 112
  %v215 = vsel %vm214, %v211, %v213
  %v216 = vsel %vm214, %v209, %v211
  %v217 = vsel %vm214, %v207, %v209
  %v218 = vsel %vm214, %v213, %v207
  %v223 = vrot.slane %v217, 3
  %v224 = vrot.slane %v216, 3
  %v225 = vrot.slane %v215, 3
  %v226 = vrot.slane %v218, 3
  %231 = vst [vmem:[#allocation2 + $0x40] sm:$0xe0] %v223
  %232 = vst [vmem:[#allocation2 + $0x48] sm:$0xe0] %v224
  %233 = vst [vmem:[#allocation2 + $0x50] sm:$0xe0] %v225
  %234 = vst [vmem:[#allocation2 + $0x58] sm:$0xe0] %v226
  %235 = vrot.lane.b32.xlu0 %v14, 111
  %v236 = vpop.permute.xlu0 %235
  %237 = vrot.lane.b32.xlu0 %v22, 111
  %v238 = vpop.permute.xlu0 %237
  %239 = vrot.lane.b32.xlu0 %v15, 111
  %v240 = vpop.permute.xlu0 %239
  %241 = vrot.lane.b32.xlu0 %v23, 111
  %v242 = vpop.permute.xlu0 %241
  %vm243 = vcmp.lt.s32.totalorder %v35, 111
  %v244 = vsel %vm243, %v240, %v242
  %v245 = vsel %vm243, %v238, %v240
  %v246 = vsel %vm243, %v236, %v238
  %v247 = vsel %vm243, %v242, %v236
  %248 = vst [vmem:[#allocation2 + $0x60] sm:$0x7] %v246
  %249 = vst [vmem:[#allocation2 + $0x68] sm:$0x7] %v245
  %250 = vst [vmem:[#allocation2 + $0x70] sm:$0x7] %v244
  %251 = vst [vmem:[#allocation2 + $0x78] sm:$0x7] %v247
  %v252 = vld [vmem:[#allocation2] sm:$0xff]
  %v253 = vld [vmem:[#allocation2 + $0x8] sm:$0xff]
  %v254 = vld [vmem:[#allocation2 + $0x10] sm:$0xff]
  %v255 = vld [vmem:[#allocation2 + $0x18] sm:$0xff]
  %v256 = vld [vmem:[#allocation2 + $0x20] sm:$0xff]
  %v257 = vld [vmem:[#allocation2 + $0x28] sm:$0xff]
  %v258 = vld [vmem:[#allocation2 + $0x30] sm:$0xff]
  %v259 = vld [vmem:[#allocation2 + $0x38] sm:$0xff]
  %v260 = vld [vmem:[#allocation2 + $0x40] sm:$0xff]
  %v261 = vld [vmem:[#allocation2 + $0x48] sm:$0xff]
  %v262 = vld [vmem:[#allocation2 + $0x50] sm:$0xff]
  %v263 = vld [vmem:[#allocation2 + $0x58] sm:$0xff]
  %v264 = vld [vmem:[#allocation2 + $0x60] sm:$0xff]
  %v265 = vld [vmem:[#allocation2 + $0x68] sm:$0xff]
  %v266 = vld [vmem:[#allocation2 + $0x70] sm:$0xff]
  %v267 = vld [vmem:[#allocation2 + $0x78] sm:$0xff]
  %v268 = vld [vmem:[%s2] sm:$0xff]
  %v269 = vld [vmem:[%s2 + $0x8] sm:$0xff]
  %v270 = vld [vmem:[%s2 + $0x10] sm:$0xff]
  %v271 = vld [vmem:[%s2 + $0x18] sm:$0xff]
  %v272 = vld [vmem:[%s2 + $0x20] sm:$0xff]
  %v273 = vld [vmem:[%s2 + $0x28] sm:$0xff]
  %v274 = vld [vmem:[%s2 + $0x30] sm:$0xff]
  %v275 = vld [vmem:[%s2 + $0x38] sm:$0xff]
  %v276 = vld [vmem:[%s2 + $0x40] sm:$0xff]
  %v277 = vld [vmem:[%s2 + $0x48] sm:$0xff]
  %v278 = vld [vmem:[%s2 + $0x50] sm:$0xff]
  %v279 = vld [vmem:[%s2 + $0x58] sm:$0xff]
  %v280 = vld [vmem:[%s2 + $0x60] sm:$0xff]
  %v281 = vld [vmem:[%s2 + $0x68] sm:$0xff]
  %v282 = vld [vmem:[%s2 + $0x70] sm:$0xff]
  %v283 = vld [vmem:[%s2 + $0x78] sm:$0xff]
  %v284 = vmul.f32 %v252, %v268
  %v285 = vmul.f32 %v253, %v269
  %v286 = vmul.f32 %v254, %v270
  %v287 = vmul.f32 %v255, %v271
  %v288 = vmul.f32 %v256, %v272
  %v289 = vmul.f32 %v257, %v273
  %v290 = vmul.f32 %v258, %v274
  %v291 = vmul.f32 %v259, %v275
  %v292 = vmul.f32 %v260, %v276
  %v293 = vmul.f32 %v261, %v277
  %v294 = vmul.f32 %v262, %v278
  %v295 = vmul.f32 %v263, %v279
  %v296 = vmul.f32 %v264, %v280
  %v297 = vmul.f32 %v265, %v281
  %v298 = vmul.f32 %v266, %v282
  %v299 = vmul.f32 %v267, %v283
  %v300 = vld [vmem:[%s1] sm:$0xff]
  %v301 = vld [vmem:[%s1 + $0x8] sm:$0xff]
  %vm302 = vcmask 261120
  %v304 = vsel %vm302, %v300, 0
  %v307 = vsel %vm302, %v301, 0
  %309 = vmatprep.subr.mxu0 0.0
  %310 = vmatpush1.msra.mxu0 0.0
  %311 = vmatprep.subr.mxu0 0.0
  %312 = vmatpush1.msra.mxu0 0.0
  %313 = vmatprep.subr.mxu0 0.0
  %314 = vmatpush1.msra.mxu0 0.0
  %315 = vmatprep.subr.mxu0 0.0
  %316 = vmatpush1.msra.mxu0 0.0
  %317 = vmatprep.subr.mxu0 0.0
  %318 = vmatpush1.msra.mxu0 0.0
  %319 = vmatprep.subr.mxu0 0.0
  %320 = vmatpush1.msra.mxu0 0.0
  %321 = vmatprep.subr.mxu0 0.0
  %322 = vmatpush1.msra.mxu0 0.0
  %323 = vmatprep.subr.mxu0 0.0
  %324 = vmatpush1.msra.mxu0 0.0
  %325 = vmatprep.subr.mxu0 0.0
  %326 = vmatpush1.msra.mxu0 0.0
  %327 = vmatprep.subr.mxu0 0.0
  %328 = vmatpush1.msra.mxu0 0.0
  %329 = vmatprep.subr.mxu0 0.0
  %330 = vmatpush1.msra.mxu0 0.0
  %331 = vmatprep.subr.mxu0 0.0
  %332 = vmatpush1.msra.mxu0 0.0
  %333 = vmatprep.subr.mxu0 %v297
  %334 = vmatpush1.msra.mxu0 %v296
  %335 = vmatprep.subr.mxu0 %v293
  %336 = vmatpush1.msra.mxu0 %v292
  %337 = vmatprep.subr.mxu0 %v289
  %338 = vmatpush1.msra.mxu0 %v288
  %339 = vmatprep.subr.mxu0 %v285
  %340 = vmatpush1.msra.mxu0 %v284
  %341 = vmatprep.subr.mxu0 0.0
  %342 = vmatpush2.msra.mxu0 0.0
  %343 = vmatprep.subr.mxu0 0.0
  %344 = vmatpush2.msra.mxu0 0.0
  %345 = vmatprep.subr.mxu0 0.0
  %346 = vmatpush2.msra.mxu0 0.0
  %347 = vmatprep.subr.mxu0 0.0
  %348 = vmatpush2.msra.mxu0 0.0
  %349 = vmatprep.subr.mxu0 0.0
  %350 = vmatpush2.msra.mxu0 0.0
  %351 = vmatprep.subr.mxu0 0.0
  %352 = vmatpush2.msra.mxu0 0.0
  %353 = vmatprep.subr.mxu0 0.0
  %354 = vmatpush2.msra.mxu0 0.0
  %355 = vmatprep.subr.mxu0 0.0
  %356 = vmatpush2.msra.mxu0 0.0
  %357 = vmatprep.subr.mxu0 0.0
  %358 = vmatpush2.msra.mxu0 0.0
  %359 = vmatprep.subr.mxu0 0.0
  %360 = vmatpush2.msra.mxu0 0.0
  %361 = vmatprep.subr.mxu0 0.0
  %362 = vmatpush2.msra.mxu0 0.0
  %363 = vmatprep.subr.mxu0 0.0
  %364 = vmatpush2.msra.mxu0 0.0
  %365 = vmatprep.subr.mxu0 0.0
  %366 = vmatpush2.msra.mxu0 0.0
  %367 = vmatprep.subr.mxu0 0.0
  %368 = vmatpush2.msra.mxu0 0.0
  %369 = vmatprep.subr.mxu0 0.0
  %370 = vmatpush2.msra.mxu0 0.0
  %371 = vmatprep.subr.mxu0 0.0
  %372 = vmatpush2.msra.mxu0 0.0
  %373 = vmatprep.mubr.f32.mxu0 0.0
  %374 = vmatmul.mubr.f32.gmra.mxu0 %v304
  %v375 = vpop.f32.mrf.mxu0
  %v376 = vadd.f32 0.0, %v375
  %v377 = vpop.f32.mrf.mxu0
  %v378 = vadd.f32 0.0, %v377
  %379 = vmatprep.mubr.f32.mxu0 0.0
  %380 = vmatmul.mubr.f32.gmra.mxu0 %v307
  %v381 = vpop.f32.mrf.mxu0
  %v382 = vadd.f32 0.0, %v381
  %v383 = vpop.f32.mrf.mxu0
  %v384 = vadd.f32 0.0, %v383
  %385 = vdwg.mxu0
  %386 = vmatprep.subr.mxu0 0.0
  %387 = vmatpush1.msra.mxu0 0.0
  %388 = vmatprep.subr.mxu0 0.0
  %389 = vmatpush1.msra.mxu0 0.0
  %390 = vmatprep.subr.mxu0 0.0
  %391 = vmatpush1.msra.mxu0 0.0
  %392 = vmatprep.subr.mxu0 0.0
  %393 = vmatpush1.msra.mxu0 0.0
  %394 = vmatprep.subr.mxu0 0.0
  %395 = vmatpush1.msra.mxu0 0.0
  %396 = vmatprep.subr.mxu0 0.0
  %397 = vmatpush1.msra.mxu0 0.0
  %398 = vmatprep.subr.mxu0 0.0
  %399 = vmatpush1.msra.mxu0 0.0
  %400 = vmatprep.subr.mxu0 0.0
  %401 = vmatpush1.msra.mxu0 0.0
  %402 = vmatprep.subr.mxu0 0.0
  %403 = vmatpush1.msra.mxu0 0.0
  %404 = vmatprep.subr.mxu0 0.0
  %405 = vmatpush1.msra.mxu0 0.0
  %406 = vmatprep.subr.mxu0 0.0
  %407 = vmatpush1.msra.mxu0 0.0
  %408 = vmatprep.subr.mxu0 0.0
  %409 = vmatpush1.msra.mxu0 0.0
  %410 = vmatprep.subr.mxu0 %v299
  %411 = vmatpush1.msra.mxu0 %v298
  %412 = vmatprep.subr.mxu0 %v295
  %413 = vmatpush1.msra.mxu0 %v294
  %414 = vmatprep.subr.mxu0 %v291
  %415 = vmatpush1.msra.mxu0 %v290
  %416 = vmatprep.subr.mxu0 %v287
  %417 = vmatpush1.msra.mxu0 %v286
  %418 = vmatprep.subr.mxu0 0.0
  %419 = vmatpush2.msra.mxu0 0.0
  %420 = vmatprep.subr.mxu0 0.0
  %421 = vmatpush2.msra.mxu0 0.0
  %422 = vmatprep.subr.mxu0 0.0
  %423 = vmatpush2.msra.mxu0 0.0
  %424 = vmatprep.subr.mxu0 0.0
  %425 = vmatpush2.msra.mxu0 0.0
  %426 = vmatprep.subr.mxu0 0.0
  %427 = vmatpush2.msra.mxu0 0.0
  %428 = vmatprep.subr.mxu0 0.0
  %429 = vmatpush2.msra.mxu0 0.0
  %430 = vmatprep.subr.mxu0 0.0
  %431 = vmatpush2.msra.mxu0 0.0
  %432 = vmatprep.subr.mxu0 0.0
  %433 = vmatpush2.msra.mxu0 0.0
  %434 = vmatprep.subr.mxu0 0.0
  %435 = vmatpush2.msra.mxu0 0.0
  %436 = vmatprep.subr.mxu0 0.0
  %437 = vmatpush2.msra.mxu0 0.0
  %438 = vmatprep.subr.mxu0 0.0
  %439 = vmatpush2.msra.mxu0 0.0
  %440 = vmatprep.subr.mxu0 0.0
  %441 = vmatpush2.msra.mxu0 0.0
  %442 = vmatprep.subr.mxu0 0.0
  %443 = vmatpush2.msra.mxu0 0.0
  %444 = vmatprep.subr.mxu0 0.0
  %445 = vmatpush2.msra.mxu0 0.0
  %446 = vmatprep.subr.mxu0 0.0
  %447 = vmatpush2.msra.mxu0 0.0
  %448 = vmatprep.subr.mxu0 0.0
  %449 = vmatpush2.msra.mxu0 0.0
  %450 = vmatprep.mubr.f32.mxu0 0.0
  %451 = vmatmul.mubr.f32.gmra.mxu0 %v304
  %v452 = vpop.f32.mrf.mxu0
  %v453 = vadd.f32 0.0, %v452
  %v454 = vpop.f32.mrf.mxu0
  %v455 = vadd.f32 0.0, %v454
  %456 = vmatprep.mubr.f32.mxu0 0.0
  %457 = vmatmul.mubr.f32.gmra.mxu0 %v307
  %v458 = vpop.f32.mrf.mxu0
  %v459 = vadd.f32 0.0, %v458
  %v460 = vpop.f32.mrf.mxu0
  %v461 = vadd.f32 0.0, %v460
  %462 = vdwg.mxu0
  %463 = vst [vmem:[%s3] sm:$0xff] %v376
  %464 = vst [vmem:[%s3 + $0x8] sm:$0xff] %v378
  %465 = vst [vmem:[%s3 + $0x10] sm:$0xff] %v453
  %466 = vst [vmem:[%s3 + $0x18] sm:$0xff] %v455
  %467 = vst [vmem:[%s3 + $0x20] sm:$0xff] %v382
  %468 = vst [vmem:[%s3 + $0x28] sm:$0xff] %v384
  %469 = vst [vmem:[%s3 + $0x30] sm:$0xff] %v459
  %470 = vst [vmem:[%s3 + $0x38] sm:$0xff] %v461
  // Predicated region
  $region14: #{seg_qyl_forward.1} parent=0 // pred_check
    _
  $region15: #{seg_qyl_forward.1} parent=0 // pred_check_branch
    %472 = sbr.rel (0) target = $region17
  $region16: #{seg_qyl_forward.1} parent=0 // pred_region
    _
  $region17: #{seg_qyl_forward.1} parent=0 // pred_fallthru
    _
  // Predicated region
  $region18: #{seg_qyl_forward.1} parent=0 // pred_check
    _
  $region19: #{seg_qyl_forward.1} parent=0 // pred_check_branch
    %474 = sbr.rel (0) target = $region21
  $region20: #{seg_qyl_forward.1} parent=0 // pred_region
    _
  $region21: #{seg_qyl_forward.1} parent=0 // pred_fallthru
    _

</llo_original>
